<compile_context>
chip_gen: v7x
topology: tpu7x:2x2x1
jax: 0.10.0
libtpu: 0.0.40
codegen_flags: <defaults>
</compile_context>

<pallas_src>
import jax
import jax.numpy as jnp
import numpy as np
from jax.experimental import pallas as pl
from jax.experimental.pallas import tpu as pltpu

_LANE = 128
_SUBLANE = 8


# ------------------ path 1: zero-traffic aliased identity -------------------

def _noop_kernel(x_hbm_ref, o_hbm_ref):
    # Output is aliased onto the input buffer, so the identity forward needs no
    # DMA, no VMEM round trip, and no vreg traffic at all.
    # TODO(synk): forward() is abstract in BaseNetwork; a concrete subclass
    # would replace this body with real compute (conv / matmul / ...).
    pass


def _aliased_identity(x):
    return pl.pallas_call(
        _noop_kernel,
        out_shape=jax.ShapeDtypeStruct(x.shape, x.dtype),
        in_specs=[pl.BlockSpec(memory_space=pl.ANY)],   # leave input in HBM
        out_specs=pl.BlockSpec(memory_space=pl.ANY),    # output = same buffer
        input_output_aliases={0: 0},
    )(x)


# ---------------- path 2: materialized copy (tuned tiling) ------------------

def _copy_kernel(x_ref, o_ref):
    o_ref[...] = x_ref[...]


def _materialized_copy(x, target_tile_bytes=2 * 1024 * 1024):
    """Identity that writes a fresh buffer, streamed through VMEM.

    Tiling choices (per perf review):
      * lane-dense view: last dim is the largest divisor of n among
        {8192, ..., 128}  -> unmasked vst + full-width DMA descriptors.
      * ~2 MiB tiles: double-buffered input + output buffers stay <= 8 MiB,
        under v5e's 16 MiB default scoped VMEM and far under v7x's 64 MiB.
      * dtype-aware sublane multiple (8 f32 / 16 bf16 / 32 int8) so tiles map
        onto full packed vregs.
      * "parallel" grid axis so v7x's 2 TensorCores split the stream.
    """
    orig_shape = x.shape
    dtype = x.dtype
    n = int(x.size)
    flat = x.reshape(-1)

    lanes = None
    for cand in (8192, 4096, 2048, 1024, 512, 256, 128):
        if n % cand == 0:
            lanes = cand
            break
    if lanes is None:
        # TODO(synk): ragged sizes — a masked store on the last grid step would
        # avoid this pad/slice round trip; not needed for the shapes used here.
        lanes = _LANE
        flat = jnp.pad(flat, (0, (-n) % lanes))
    rows = flat.shape[0] // lanes

    itemsize = np.dtype(dtype).itemsize
    sub = _SUBLANE * max(1, 4 // itemsize)               # packed-sublane count
    max_rows = max(sub, (target_tile_bytes // (lanes * itemsize)) // sub * sub)
    block_rows = rows if rows <= max_rows else max_rows  # never whole-array for
                                                         # large inputs (VMEM cap)

    out2d = pl.pallas_call(
        _copy_kernel,
        out_shape=jax.ShapeDtypeStruct((rows, lanes), dtype),
        grid=(pl.cdiv(rows, block_rows),),
        in_specs=[pl.BlockSpec((block_rows, lanes), lambda i: (i, 0))],
        out_specs=pl.BlockSpec((block_rows, lanes), lambda i: (i, 0)),
        compiler_params=pltpu.CompilerParams(
            dimension_semantics=("parallel",)),
    )(flat.reshape(rows, lanes))

    out = out2d.reshape(-1)
    if out.shape[0] != n:
        out = out[:n]
    return out.reshape(orig_shape)


# --------------------------- BaseNetwork wrapper ----------------------------

class BaseNetworkPallas:
    """JAX/Pallas equivalent of the abstract PyTorch BaseNetwork."""

    def __init__(self, config):
        self.config = config
        # torch.manual_seed(config['seed'])  ->  deterministic JAX key
        self.key = jax.random.PRNGKey(config["seed"])
        # The abstract base class instantiates no layers -> empty param list.
        self.params = []

    def set_weights(self, weights):
        """Override current weights with given weight list values."""
        weights = iter(weights)
        self.params = [jnp.asarray(next(weights)) for _ in self.params]

    def get_weights(self):
        """Get current weights as list (of host numpy arrays)."""
        return [jax.device_get(p) for p in self.params]

    def forward(self, x):
        # Base-class forward is abstract; the faithful contract is identity.
        # Default path: true no-op (output aliases the input buffer on HBM).
        return _aliased_identity(x)

    def forward_copy(self, x):
        # Identity that materializes a fresh output buffer on-TPU.
        return _materialized_copy(x)

    def __call__(self, x):
        return self.forward(x)


# --------------------------------- main -------------------------------------

if __name__ == "__main__":
    config = {"seed": 0}
    net = BaseNetworkPallas(config)

    key = jax.random.PRNGKey(0)
    # NCHW input, small shapes: batch=2, channels=4, spatial=16x16
    x = jax.random.normal(key, (2, 4, 16, 16), dtype=jnp.float32)
    x_np = jax.device_get(x)   # host snapshot (the aliased path may donate x)

    # Materialized-copy identity (run first, while x is guaranteed live).
    y_copy = jax.block_until_ready(net.forward_copy(x))

    # Default forward: zero-traffic aliased identity.
    y = jax.block_until_ready(net(x))

    # Sanity: base-class forward contract (identity) and weight plumbing.
    assert y.shape == x_np.shape and y.dtype == x_np.dtype
    assert y_copy.shape == x_np.shape and y_copy.dtype == x_np.dtype
    assert np.array_equal(jax.device_get(y), x_np)
    assert np.array_equal(jax.device_get(y_copy), x_np)
    assert net.get_weights() == []   # abstract base class owns no parameters

    print("KERNEL_OK")
</pallas_src>

<mosaic_0001>
module attributes {stable_mosaic.version = 11 : i64} {
  func.func @_copy_kernel(%arg0: i32, %arg1: memref<1x2048xf32, #tpu.memory_space<vmem>>, %arg2: memref<1x2048xf32, #tpu.memory_space<vmem>>) attributes {dimension_semantics = [#tpu.dimension_semantics<parallel>], iteration_bounds = array<i64: 1>, scalar_prefetch = 0 : i64, scratch_operands = 0 : i64, tpu.core_type = #tpu.core_type<tc>, window_params = [{transform_indices = @transform_0, window_bounds = array<i64: 1, 2048>}, {transform_indices = @transform_1, window_bounds = array<i64: 1, 2048>}]} {
    %c0 = arith.constant 0 : index
    %c0_0 = arith.constant 0 : index
    %0 = vector.load %arg1[%c0, %c0_0] : memref<1x2048xf32, #tpu.memory_space<vmem>>, vector<1x2048xf32>
    %c0_1 = arith.constant 0 : index
    %c0_2 = arith.constant 0 : index
    %1 = vector.load %arg2[%c0_1, %c0_2] : memref<1x2048xf32, #tpu.memory_space<vmem>>, vector<1x2048xf32>
    tpu.vector_store %arg2[%c0_1, %c0_2], %0 {strides = array<i32>} : memref<1x2048xf32, #tpu.memory_space<vmem>>, vector<1x2048xf32>,
    return
  }
  func.func @transform_0(%arg0: i32) -> (i32, i32) {
    %c0_i32 = arith.constant 0 : i32
    %c0_i32_0 = arith.constant 0 : i32
    return %arg0, %c0_i32 : i32, i32
  }
  func.func @transform_1(%arg0: i32) -> (i32, i32) {
    %c0_i32 = arith.constant 0 : i32
    %c0_i32_0 = arith.constant 0 : i32
    return %arg0, %c0_i32 : i32, i32
  }
}

</mosaic_0001>

<llo_original>
// kernel: tpu_custom_call.1
$region0: #{tpu_custom_call.1}
  #allocation0 [shape = 'u32[]', space=smem, size = 0x4, offset = 0x4, fixed_abs, tag = 'smem constant byte address 0x4 - core index']
  #allocation1 [shape = 'u32[144,128]{1,0:T(1,128)}', space=vmem, size = 0x12000, scoped, tag = 'internal scratch']
  %s0 = inlined_call_operand.hbm [shape: f32[1,2048], index: 0, kind: input, shape index: {}]
  %s1 = inlined_call_operand.hbm [shape: f32[1,2048], index: 1, kind: output, shape index: {}]
  %s2 = sld [smem:[#allocation0]]
  $region18: #{tpu_custom_call.1} parent=0
    _
  %s4 = ssub.s32 1, %s2
  %s5 = scalar_select 0, %s4, %s2
  $region1: #{tpu_custom_call.1} parent=0
    #allocation2 [shape = 'u8[8192]{0}', space=vmem, size = 0x2000, scoped, tag = 'input window, operand 0, single buffered']
    #allocation3 [shape = 's32[1]{0}', space=sflag, size = 0x4, scoped, tag = 'scoped memory for tpu_custom_call.1']
    #allocation4 [shape = 's32[1]{0}', space=sflag, size = 0x4, scoped, tag = 'scoped memory for tpu_custom_call.1']
    #allocation5 [shape = 'u8[8192]{0}', space=vmem, size = 0x2000, scoped, tag = 'output window, operand 0, single buffered']
    %6 = vsyncpa [#allocation3], 0
    %7 = vsyncpa [#allocation4], 0
    // Predicated region
    $region2: #{tpu_custom_call.1} parent=1 // pred_check
      _
    $region3: #{tpu_custom_call.1} parent=1 // pred_check_branch
      %9 = sbr.rel (0) target = $region5
    $region4: #{tpu_custom_call.1} parent=1 // pred_region
      %s11 = ssub.s32 256, 256
      %12 = vsyncadd [#allocation3], %s11
      %s14 = sshll.u32 [#allocation2], 4
      %s15 = int_to_ptr.vmem [resolvable:$true] %s14
      %17 = dma.hbm_to_vmem [thread:$0]  %s0, 256, %s15, [#allocation3]
    $region5: #{tpu_custom_call.1} parent=1 // pred_fallthru
      _
    // Predicated region
    $region6: #{tpu_custom_call.1} parent=1 // pred_check
      _
    $region7: #{tpu_custom_call.1} parent=1 // pred_check_branch
      %19 = sbr.rel (0) target = $region9
    $region8: #{tpu_custom_call.1} parent=1 // pred_region
      %20 = dma.done [#allocation3], 256
    $region9: #{tpu_custom_call.1} parent=1 // pred_fallthru
      _
    %v21 = vld [vmem:[#allocation2] sm:$0xff]
    %v22 = vld [vmem:[#allocation2 + $0x8] sm:$0xff]
    %23 = vst [vmem:[#allocation5] sm:$0xff] %v21
    %24 = vst [vmem:[#allocation5 + $0x8] sm:$0xff] %v22
    // Predicated region
    $region10: #{tpu_custom_call.1} parent=1 // pred_check
      _
    $region11: #{tpu_custom_call.1} parent=1 // pred_check_branch
      %26 = sbr.rel (0) target = $region13
    $region12: #{tpu_custom_call.1} parent=1 // pred_region
      %s28 = ssub.s32 256, 256
      %29 = vsyncadd [#allocation4], %s28
      %s31 = sshll.u32 [#allocation5], 4
      %s32 = int_to_ptr.vmem [resolvable:$true] %s31
      %34 = dma.vmem_to_hbm [thread:$0]  %s32, 256, %s1, [#allocation4]
    $region13: #{tpu_custom_call.1} parent=1 // pred_fallthru
      _
    // Predicated region
    $region14: #{tpu_custom_call.1} parent=1 // pred_check
      _
    $region15: #{tpu_custom_call.1} parent=1 // pred_check_branch
      %36 = sbr.rel (0) target = $region17
    $region16: #{tpu_custom_call.1} parent=1 // pred_region
      %37 = dma.done [#allocation4], 256
    $region17: #{tpu_custom_call.1} parent=1 // pred_fallthru
      _
    %38 = vsyncpa [#allocation3], 1
    %39 = vsyncpa [#allocation4], 1

</llo_original>
